<compile_context>
chip_gen: v7x
topology: tpu7x:2x2x1
jax: 0.10.0
libtpu: 0.0.40
codegen_flags: <defaults>
</compile_context>

<pallas_src>
import functools

import jax
import jax.numpy as jnp
from jax.experimental import pallas as pl
from jax.experimental.pallas import tpu as pltpu

_MiB = 1024 * 1024
_LANE = 128


def _bilinear_interp_matrix(in_size, out_size, scale_factor, dtype=jnp.float32):
    """(out_size, in_size) matrix matching torch.nn.functional.interpolate
    with mode='bilinear', align_corners=False, along one axis."""
    dst = jnp.arange(out_size, dtype=jnp.float32)
    src = (dst + 0.5) / float(scale_factor) - 0.5        # half-pixel centres
    src = jnp.maximum(src, 0.0)                          # clamp-low like torch
    lo = jnp.floor(src).astype(jnp.int32)
    lo = jnp.minimum(lo, in_size - 1)
    hi = jnp.minimum(lo + 1, in_size - 1)
    frac = src - lo.astype(jnp.float32)
    rows = jnp.arange(out_size)
    mat = jnp.zeros((out_size, in_size), dtype=jnp.float32)
    mat = mat.at[rows, lo].add(1.0 - frac)
    mat = mat.at[rows, hi].add(frac)
    return mat.astype(dtype)


def _vmem_capacity_bytes():
    """Physical VMEM of the current TPU generation (conservative fallback)."""
    try:
        info = pltpu.get_tpu_info()
        cap = getattr(info, "vmem_capacity_bytes", None)
        if cap:
            return int(cap)
    except Exception:
        pass
    return 64 * _MiB  # v7x has the smallest VMEM per TensorCore


def _pad_lane(n):
    return pl.cdiv(n, _LANE) * _LANE


def _plan_batch_blocks(b, per_img_bytes, resident_bytes, itemsize, vmem_cap):
    """Pick (bc, nblk): block fits a generation-aware VMEM budget, the grid has
    >= 2 steps whenever b > 1 (so in/out DMA double-buffers against compute),
    and an even number of steps (balanced across the 2 TensorCores on v7x)."""
    sub = max(8, 32 // max(itemsize, 1))         # sublane tile: f32->8, bf16->16
    budget = max(4 * _MiB, vmem_cap // 3 - 2 * resident_bytes)
    bc_cap = max(sub, (budget // max(per_img_bytes, 1)) // sub * sub)

    if b <= 1:
        return sub, 1
    if b <= sub:
        return sub, 2                            # tiny batch: 2 half-padded steps

    min_steps = 4 if b >= 4 * sub else 2
    nblk = max(min_steps, pl.cdiv(b, bc_cap))
    if nblk % 2 == 1:
        nblk += 1
    bc = pl.cdiv(pl.cdiv(b, nblk), sub) * sub    # round block up to sublane tile
    nblk = pl.cdiv(b, bc)
    if nblk > 1 and nblk % 2 == 1:
        nblk += 1
    return int(bc), int(nblk)


# -----------------------------------------------------------------------------
# Kernel bodies
# -----------------------------------------------------------------------------
def _kron_kernel(x_ref, k_ref, o_ref):
    # x_ref: (bc, H_in*W_in)            lane-dense flattened image block
    # k_ref: (H_in*W_in, H_out*W_out)   f32 Kronecker bilinear weights
    # o_ref: (bc, H_out*W_out)          lane-dense output slab (same bytes as NCHW)
    x = x_ref[...].astype(jnp.float32)
    o_ref[...] = jnp.dot(
        x, k_ref[...], preferred_element_type=jnp.float32).astype(o_ref.dtype)


def _separable_kernel(x_ref, wh_ref, ww_ref, o_ref):
    # x_ref:  (bc, H_in, W_in)
    # wh_ref: (H_out, H_in)   f32 bilinear weights along H
    # ww_ref: (W_in, W_out)   f32 bilinear weights along W
    # o_ref:  (bc, H_out, W_out)
    f32 = jnp.float32
    x = x_ref[...].astype(f32)
    bc = x.shape[0]

    # W pass: contract the lane (minor) dim in the natural layout - no transpose.
    wwb = jnp.broadcast_to(ww_ref[...], (bc,) + ww_ref.shape)       # (bc, W_in, W_out)
    t = jax.lax.dot_general(
        x, wwb, dimension_numbers=(((2,), (1,)), ((0,), (0,))),
        preferred_element_type=f32)                                  # (bc, H_in, W_out)

    # H pass: batched contraction over the sublane dim; lands directly in
    # (bc, H_out, W_out), so the output keeps the natural NCHW layout.
    whb = jnp.broadcast_to(wh_ref[...], (bc,) + wh_ref.shape)       # (bc, H_out, H_in)
    out = jax.lax.dot_general(
        whb, t, dimension_numbers=(((2,), (1,)), ((0,), (0,))),
        preferred_element_type=f32)                                  # (bc, H_out, W_out)
    o_ref[...] = out.astype(o_ref.dtype)


# -----------------------------------------------------------------------------
# Wrapper
# -----------------------------------------------------------------------------
@functools.partial(jax.jit,
                   static_argnames=("scale_factor", "mode", "_force_separable"))
def interpolate(x, scale_factor=2.0, mode="bilinear", _force_separable=False):
    """Pallas equivalent of Interpolate(scale_factor, mode).forward(x), NCHW."""
    if mode != "bilinear":
        # TODO(synk): only 'bilinear' (align_corners=False) is implemented here.
        raise NotImplementedError(f"mode={mode!r} not implemented")

    n, c, h_in, w_in = x.shape
    h_out = int(h_in * float(scale_factor))
    w_out = int(w_in * float(scale_factor))
    b = n * c
    itemsize = x.dtype.itemsize
    vmem_cap = _vmem_capacity_bytes()

    # f32 weights; all intermediates stay f32 in-kernel (closest to PyTorch).
    wh = _bilinear_interp_matrix(h_in, h_out, scale_factor)          # (H_out, H_in)
    ww_t = _bilinear_interp_matrix(w_in, w_out, scale_factor).T      # (W_in, W_out)

    hw_in = h_in * w_in
    hw_out = h_out * w_out
    kron_bytes = _pad_lane(hw_out) * pl.cdiv(hw_in, 8) * 8 * 4
    use_kron = (not _force_separable) and hw_in <= 256 and kron_bytes <= 2 * _MiB

    if use_kron:
        # ---- small-spatial path: one lane-dense MXU matmul per block -------
        kron = jnp.einsum("oh,wp->hwop", wh, ww_t).reshape(hw_in, hw_out)
        per_img = (2 * itemsize + 4) * (_pad_lane(hw_in) + _pad_lane(hw_out))
        bc, nblk = _plan_batch_blocks(b, per_img, kron_bytes, itemsize, vmem_cap)
        b_pad = bc * nblk

        x_flat = x.reshape(b, hw_in)
        if b_pad != b:
            x_flat = jnp.pad(x_flat, ((0, b_pad - b), (0, 0)))

        flops = 2 * b_pad * hw_in * hw_out
        bytes_accessed = b_pad * (hw_in + hw_out) * itemsize + kron_bytes
        footprint = bc * per_img + 2 * kron_bytes
        vmem_limit = int(min(vmem_cap - 8 * _MiB,
                             max(32 * _MiB, footprint + 16 * _MiB)))

        out_flat = pl.pallas_call(
            _kron_kernel,
            out_shape=jax.ShapeDtypeStruct((b_pad, hw_out), x.dtype),
            grid_spec=pltpu.PrefetchScalarGridSpec(
                num_scalar_prefetch=0,
                grid=(nblk,),
                in_specs=[
                    pl.BlockSpec((bc, hw_in), lambda i: (i, 0)),
                    pl.BlockSpec((hw_in, hw_out), lambda i: (0, 0)),
                ],
                out_specs=pl.BlockSpec((bc, hw_out), lambda i: (i, 0)),
            ),
            compiler_params=pltpu.CompilerParams(
                dimension_semantics=("parallel",),
                vmem_limit_bytes=vmem_limit),
            cost_estimate=pl.CostEstimate(
                flops=int(flops), transcendentals=0,
                bytes_accessed=int(bytes_accessed)),
        )(x_flat, kron)
        # Flat slab has identical row-major bytes as NCHW: reshape is free.
        return out_flat[:b].reshape(n, c, h_out, w_out)

    # ---- general path: two transpose-free batched matmuls ------------------
    w_in_p, w_out_p, h_in_p = _pad_lane(w_in), _pad_lane(w_out), _pad_lane(h_in)
    per_img = 2 * itemsize * (h_in * w_in_p + h_out * w_out_p)         # dbl-buffered I/O
    per_img += 4 * (h_in * w_in_p + h_in * w_out_p + h_out * w_out_p)  # f32 temps
    per_img += 4 * (h_out * h_in_p + w_in * w_out_p)                   # broadcast weights
    resident = 4 * (h_out * h_in_p + w_in * w_out_p)
    bc, nblk = _plan_batch_blocks(b, per_img, resident, itemsize, vmem_cap)
    b_pad = bc * nblk

    x3 = x.reshape(b, h_in, w_in)
    if b_pad != b:
        x3 = jnp.pad(x3, ((0, b_pad - b), (0, 0), (0, 0)))

    flops = 2 * b_pad * (h_in * w_in * w_out + h_out * h_in * w_out)
    bytes_accessed = b_pad * (h_in * w_in + h_out * w_out) * itemsize + resident
    footprint = bc * per_img + 2 * resident
    vmem_limit = int(min(vmem_cap - 8 * _MiB,
                         max(32 * _MiB, footprint + 16 * _MiB)))

    out3 = pl.pallas_call(
        _separable_kernel,
        out_shape=jax.ShapeDtypeStruct((b_pad, h_out, w_out), x.dtype),
        grid_spec=pltpu.PrefetchScalarGridSpec(
            num_scalar_prefetch=0,
            grid=(nblk,),
            in_specs=[
                pl.BlockSpec((bc, h_in, w_in), lambda i: (i, 0, 0)),
                pl.BlockSpec((h_out, h_in), lambda i: (0, 0)),
                pl.BlockSpec((w_in, w_out), lambda i: (0, 0)),
            ],
            out_specs=pl.BlockSpec((bc, h_out, w_out), lambda i: (i, 0, 0)),
        ),
        compiler_params=pltpu.CompilerParams(
            dimension_semantics=("parallel",),
            vmem_limit_bytes=vmem_limit),
        cost_estimate=pl.CostEstimate(
            flops=int(flops), transcendentals=0,
            bytes_accessed=int(bytes_accessed)),
    )(x3, wh, ww_t)
    return out3[:b].reshape(n, c, h_out, w_out)


if __name__ == "__main__":
    key = jax.random.PRNGKey(0)
    N, C, H, W = 2, 4, 16, 16
    x = jax.random.normal(key, (N, C, H, W), dtype=jnp.float32)

    # Pure-JAX reference using the same interpolation matrices.
    wh = _bilinear_interp_matrix(H, 2 * H, 2.0)
    ww = _bilinear_interp_matrix(W, 2 * W, 2.0)
    ref = jnp.einsum("oh,nchw,pw->ncop", wh, x, ww)

    # Small-spatial (Kronecker, lane-dense single-matmul) path.
    out = jax.block_until_ready(interpolate(x, scale_factor=2.0, mode="bilinear"))
    assert out.shape == (N, C, 2 * H, 2 * W), out.shape
    assert jnp.allclose(out, ref, atol=1e-5, rtol=1e-5), "kron path mismatch"

    # Also exercise the general separable (large-spatial fallback) path.
    out2 = jax.block_until_ready(
        interpolate(x, scale_factor=2.0, mode="bilinear", _force_separable=True))
    assert jnp.allclose(out2, ref, atol=1e-5, rtol=1e-5), "separable path mismatch"

    print("KERNEL_OK")
</pallas_src>

<mosaic_0001>
module attributes {stable_mosaic.version = 11 : i64} {
  func.func private @main(%arg0: i32) attributes {dimension_semantics = [#tpu.dimension_semantics<core_parallel>], iteration_bounds = array<i64: 2>, tpu.core_type = #tpu.core_type<sc_scalar_subcore>, window_params = []} {
    return
  }
}

module attributes {stable_mosaic.version = 11 : i64} {
  func.func private @main(%arg0: i32) attributes {dimension_semantics = [#tpu.dimension_semantics<core_parallel>], iteration_bounds = array<i64: 2>, tpu.core_type = #tpu.core_type<sc_scalar_subcore>, window_params = []} {
    return
  }
}

module attributes {stable_mosaic.version = 11 : i64} {
  func.func @_kron_kernel(%arg0: i32, %arg1: memref<8x256xf32, #tpu.memory_space<vmem>>, %arg2: memref<256x1024xf32, #tpu.memory_space<vmem>>, %arg3: memref<8x1024xf32, #tpu.memory_space<vmem>>) attributes {dimension_semantics = [#tpu.dimension_semantics<parallel>], iteration_bounds = array<i64: 2>, scalar_prefetch = 0 : i64, scratch_operands = 0 : i64, tpu.core_type = #tpu.core_type<tc>, window_params = [{transform_indices = @transform_0, window_bounds = array<i64: 8, 256>}, {pipeline_mode = #tpu.pipeline_mode<synchronous>, transform_indices = @transform_1, window_bounds = array<i64: 256, 1024>}, {transform_indices = @transform_2, window_bounds = array<i64: 8, 1024>}]} {
    %c0 = arith.constant 0 : index
    %c0_0 = arith.constant 0 : index
    %0 = vector.load %arg1[%c0, %c0_0] : memref<8x256xf32, #tpu.memory_space<vmem>>, vector<8x256xf32>
    %c0_1 = arith.constant 0 : index
    %c0_2 = arith.constant 0 : index
    %1 = vector.load %arg2[%c0_1, %c0_2] : memref<256x1024xf32, #tpu.memory_space<vmem>>, vector<256x1024xf32>
    %cst = arith.constant dense<0.000000e+00> : vector<8x1024xf32>
    %2 = tpu.matmul %0, %1, %cst {dimension_numbers = #tpu.dot_dimension_numbers<[1], [0], [0], [1], [0, 0, 1, 1], [], []>} : vector<8x256xf32>, vector<256x1024xf32>, vector<8x1024xf32> -> vector<8x1024xf32>
    %c0_3 = arith.constant 0 : index
    %c0_4 = arith.constant 0 : index
    %3 = vector.load %arg3[%c0_3, %c0_4] : memref<8x1024xf32, #tpu.memory_space<vmem>>, vector<8x1024xf32>
    tpu.vector_store %arg3[%c0_3, %c0_4], %2 {strides = array<i32>} : memref<8x1024xf32, #tpu.memory_space<vmem>>, vector<8x1024xf32>,
    return
  }
  func.func @transform_0(%arg0: i32) -> (i32, i32) {
    %c0_i32 = arith.constant 0 : i32
    %c0_i32_0 = arith.constant 0 : i32
    return %arg0, %c0_i32 : i32, i32
  }
  func.func @transform_1(%arg0: i32) -> (i32, i32) {
    %c0_i32 = arith.constant 0 : i32
    %c0_i32_0 = arith.constant 0 : i32
    %c0_i32_1 = arith.constant 0 : i32
    return %c0_i32, %c0_i32_0 : i32, i32
  }
  func.func @transform_2(%arg0: i32) -> (i32, i32) {
    %c0_i32 = arith.constant 0 : i32
    %c0_i32_0 = arith.constant 0 : i32
    return %arg0, %c0_i32 : i32, i32
  }
}

</mosaic_0001>

<llo_original>
// kernel: interpolate.1
$region0: #{interpolate.1}
  #allocation0 [shape = 'u32[]', space=smem, size = 0x4, offset = 0x4, fixed_abs, tag = 'smem constant byte address 0x4 - core index']
  #allocation1 [shape = 'u32[144,128]{1,0:T(1,128)}', space=vmem, size = 0x12000, scoped, tag = 'internal scratch']
  %s0 = inlined_call_operand.vmem [shape: f32[16,256], index: 0, kind: input, shape index: {}]
  %s1 = inlined_call_operand.vmem [shape: f32[256,1024], index: 1, kind: input, shape index: {}]
  %s2 = inlined_call_operand.vmem [shape: f32[16,1024], index: 2, kind: output, shape index: {}]
  %s3 = sld [smem:[#allocation0]]
  $region41: #{interpolate.1} parent=0
    _
  %s5 = ssub.s32 1, %s3
  %s6 = scalar_select 0, %s5, %s3
  loop: start=0, step=1, limit=4
  $region2: #{interpolate.1} parent=0 // loop_pre_header
    _
  $region3: #{interpolate.1} parent=0 // loop_header
    %s8 = sphi 0, %s12
    %p9 = scmp.ge.s32.totalorder %s8, 4
    %s18 = sphi 0, %s20
    %s21 = sphi 0, %s18
    %s22 = sphi 0, %s21
    %s38 = sphi 0, %s22
    %s42 = sphi 0, %s42
    %s44 = sphi 0, %s42
    %s45 = sphi 0, %s44
    %s59 = sphi 0, %s45
    %s65 = sphi 0, %s67
    %s68 = sphi 0, %s65
    %s69 = sphi 0, %s68
    %s85 = sphi 0, %s69
  $region4: #{interpolate.1} parent=0 // loop_header_branch
    %11 = sbr.rel (%p9) target = $region8
  $region5: #{interpolate.1} parent=0 // loop_body
    %s13 = ssub.s32 %s8, 1
    %s14 = ssub.s32 %s8, 2
    %s15 = sadd.s32 %s8, 1
    %s16 = ssub.s32 %s8, %s15
    %p17 = scmp.eq.s32.totalorder %s16, 0
    %s19 = sadd.s32 %s18, 1
    %s20 = scalar_select %p17, %s18, %s19
    %p23 = pneg %p17
    %p24 = scmp.eq.s32.totalorder %s8, 1
    %p25 = por %p23, %p24
    %p26 = scmp.ne.s32.totalorder %s18, %s21
    %p27 = scmp.eq.s32.totalorder %s8, 0
    %p28 = por %p26, %p27
    %p29 = scmp.ne.s32.totalorder %s18, %s21
    %p30 = scmp.eq.s32.totalorder %s13, 1
    %p31 = por %p29, %p30
    %p32 = scmp.ne.s32.totalorder %s21, %s22
    %p33 = scmp.eq.s32.totalorder %s13, 0
    %p34 = por %p32, %p33
    %p35 = scmp.ne.s32.totalorder %s21, %s22
    %p36 = scmp.eq.s32.totalorder %s14, 1
    %p37 = por %p35, %p36
    %p39 = scmp.ne.s32.totalorder %s22, %s38
    %p40 = scmp.eq.s32.totalorder %s14, 0
    %p41 = por %p39, %p40
    %s43 = sadd.s32 %s42, 1
    %p46 = scmp.eq.s32.totalorder %s8, 1
    %p47 = scmp.ne.s32.totalorder %s42, %s44
    %p48 = scmp.eq.s32.totalorder %s8, 0
    %p49 = por %p47, %p48
    %p50 = scmp.ne.s32.totalorder %s42, %s44
    %p51 = scmp.eq.s32.totalorder %s13, 1
    %p52 = por %p50, %p51
    %p53 = scmp.ne.s32.totalorder %s44, %s45
    %p54 = scmp.eq.s32.totalorder %s13, 0
    %p55 = por %p53, %p54
    %p56 = scmp.ne.s32.totalorder %s44, %s45
    %p57 = scmp.eq.s32.totalorder %s14, 1
    %p58 = por %p56, %p57
    %p60 = scmp.ne.s32.totalorder %s45, %s59
    %p61 = scmp.eq.s32.totalorder %s14, 0
    %p62 = por %p60, %p61
    %s63 = ssub.s32 %s8, %s15
    %p64 = scmp.eq.s32.totalorder %s63, 0
    %s66 = sadd.s32 %s65, 1
    %s67 = scalar_select %p64, %s65, %s66
    %p70 = pneg %p64
    %p71 = scmp.eq.s32.totalorder %s8, 1
    %p72 = por %p70, %p71
    %p73 = scmp.ne.s32.totalorder %s65, %s68
    %p74 = scmp.eq.s32.totalorder %s8, 0
    %p75 = por %p73, %p74
    %p76 = scmp.ne.s32.totalorder %s65, %s68
    %p77 = scmp.eq.s32.totalorder %s13, 1
    %p78 = por %p76, %p77
    %p79 = scmp.ne.s32.totalorder %s68, %s69
    %p80 = scmp.eq.s32.totalorder %s13, 0
    %p81 = por %p79, %p80
    %p82 = scmp.ne.s32.totalorder %s68, %s69
    %p83 = scmp.eq.s32.totalorder %s14, 1
    %p84 = por %p82, %p83
    %p86 = scmp.ne.s32.totalorder %s69, %s85
    %p87 = scmp.eq.s32.totalorder %s14, 0
    %p88 = por %p86, %p87
    %p89 = scmp.le.s32.totalorder 1, %s8
    %p90 = scmp.lt.s32.totalorder %s8, 3
    %p91 = pnand %p89, %p90
    %p92 = pneg %p91
    // Predicated region
    $region9: #{interpolate.1} parent=5 // pred_check
      _
    $region10: #{interpolate.1} parent=5 // pred_check_branch
      %94 = sbr.rel (%p91) target = $region12
    $region11: #{interpolate.1} parent=5 // pred_region
      %s95 = ssub.s32 %s8, 1
      // Predicated region
      $region13: #{interpolate.1} parent=11 // pred_check
        %p96 = pneg %p55
      $region14: #{interpolate.1} parent=11 // pred_check_branch
        %98 = sbr.rel (%p96) target = $region16
      $region15: #{interpolate.1} parent=11 // pred_region
        _
      $region16: #{interpolate.1} parent=11 // pred_fallthru
        _
    $region12: #{interpolate.1} parent=5 // pred_fallthru
      _
    %p99 = scmp.lt.s32.totalorder %s8, 2
    // Predicated region
    $region17: #{interpolate.1} parent=5 // pred_check
      %p100 = pneg %p99
    $region18: #{interpolate.1} parent=5 // pred_check_branch
      %102 = sbr.rel (%p100) target = $region20
    $region19: #{interpolate.1} parent=5 // pred_region
      // Predicated region
      $region21: #{interpolate.1} parent=19 // pred_check
        %p103 = pneg %p28
      $region22: #{interpolate.1} parent=19 // pred_check_branch
        %105 = sbr.rel (%p103) target = $region24
      $region23: #{interpolate.1} parent=19 // pred_region
        %p106 = scmp.lt.s32.totalorder %s8, 1
        %s107 = scalar_select %p106, %s8, 1
        %s108 = smul.addr %s107, 2
        %s109 = smul.addr %s108, 8
        %s110 = scalar_lea.vmem %s0, %s109
      $region24: #{interpolate.1} parent=19 // pred_fallthru
        _
    $region20: #{interpolate.1} parent=5 // pred_fallthru
      _
    %p111 = scmp.le.s32.totalorder 1, %s8
    %p112 = scmp.lt.s32.totalorder %s8, 3
    %p113 = pnand %p111, %p112
    %p114 = pneg %p113
    // Predicated region
    $region25: #{interpolate.1} parent=5 // pred_check
      _
    $region26: #{interpolate.1} parent=5 // pred_check_branch
      %116 = sbr.rel (%p113) target = $region28
    $region27: #{interpolate.1} parent=5 // pred_region
      %s117 = ssub.s32 %s8, 1
      %p118 = scmp.lt.s32.totalorder %s13, 1
      %s119 = scalar_select %p118, %s13, 1
      %s120 = smul.addr %s119, 2
      %s121 = smul.addr %s120, 8
      %s122 = scalar_lea.vmem %s0, %s121
      %p123 = pneg %p34
      %p124 = pneg %p31
      %p125 = pneg %p55
      %p126 = pneg %p52
      %p127 = pneg %p81
      %p128 = pneg %p78
      %p129 = scmp.lt.s32.totalorder %s13, 1
      %s130 = scalar_select %p129, %s13, 1
      %s131 = smul.addr %s130, 8
      %s132 = smul.addr %s131, 8
      %s133 = scalar_lea.vmem %s2, %s132
      %p134 = scmp.lt.s32.totalorder %s13, 1
      %s135 = scalar_select %p134, %s13, 1
      %s136 = smul.addr %s135, 2
      %s137 = smul.addr %s136, 8
      %s138 = scalar_lea.vmem %s0, %s137
      %p139 = scmp.lt.s32.totalorder %s13, 1
      %s140 = scalar_select %p139, %s13, 1
      %s141 = smul.addr %s140, 8
      %s142 = smul.addr %s141, 8
      %s143 = scalar_lea.vmem %s2, %s142
      %v144 = vld [vmem:[%s138] sm:$0xff]
      %v145 = vld [vmem:[%s138 + $0x8] sm:$0xff]
      %v146 = vld [vmem:[%s1] sm:$0xff]
      %v147 = vld [vmem:[%s1 + $0x8] sm:$0xff]
      %v148 = vld [vmem:[%s1 + $0x10] sm:$0xff]
      %v149 = vld [vmem:[%s1 + $0x18] sm:$0xff]
      %v150 = vld [vmem:[%s1 + $0x20] sm:$0xff]
      %v151 = vld [vmem:[%s1 + $0x28] sm:$0xff]
      %v152 = vld [vmem:[%s1 + $0x30] sm:$0xff]
      %v153 = vld [vmem:[%s1 + $0x38] sm:$0xff]
      %v154 = vld [vmem:[%s1 + $0x40] sm:$0xff]
      %v155 = vld [vmem:[%s1 + $0x48] sm:$0xff]
      %v156 = vld [vmem:[%s1 + $0x50] sm:$0xff]
      %v157 = vld [vmem:[%s1 + $0x58] sm:$0xff]
      %v158 = vld [vmem:[%s1 + $0x60] sm:$0xff]
      %v159 = vld [vmem:[%s1 + $0x68] sm:$0xff]
      %v160 = vld [vmem:[%s1 + $0x70] sm:$0xff]
      %v161 = vld [vmem:[%s1 + $0x78] sm:$0xff]
      %v162 = vld [vmem:[%s1 + $0x80] sm:$0xff]
      %v163 = vld [vmem:[%s1 + $0x88] sm:$0xff]
      %v164 = vld [vmem:[%s1 + $0x90] sm:$0xff]
      %v165 = vld [vmem:[%s1 + $0x98] sm:$0xff]
      %v166 = vld [vmem:[%s1 + $0xa0] sm:$0xff]
      %v167 = vld [vmem:[%s1 + $0xa8] sm:$0xff]
      %v168 = vld [vmem:[%s1 + $0xb0] sm:$0xff]
      %v169 = vld [vmem:[%s1 + $0xb8] sm:$0xff]
      %v170 = vld [vmem:[%s1 + $0xc0] sm:$0xff]
      %v171 = vld [vmem:[%s1 + $0xc8] sm:$0xff]
      %v172 = vld [vmem:[%s1 + $0xd0] sm:$0xff]
      %v173 = vld [vmem:[%s1 + $0xd8] sm:$0xff]
      %v174 = vld [vmem:[%s1 + $0xe0] sm:$0xff]
      %v175 = vld [vmem:[%s1 + $0xe8] sm:$0xff]
      %v176 = vld [vmem:[%s1 + $0xf0] sm:$0xff]
      %v177 = vld [vmem:[%s1 + $0xf8] sm:$0xff]
      %v178 = vld [vmem:[%s1 + $0x100] sm:$0xff]
      %v179 = vld [vmem:[%s1 + $0x108] sm:$0xff]
      %v180 = vld [vmem:[%s1 + $0x110] sm:$0xff]
      %v181 = vld [vmem:[%s1 + $0x118] sm:$0xff]
      %v182 = vld [vmem:[%s1 + $0x120] sm:$0xff]
      %v183 = vld [vmem:[%s1 + $0x128] sm:$0xff]
      %v184 = vld [vmem:[%s1 + $0x130] sm:$0xff]
      %v185 = vld [vmem:[%s1 + $0x138] sm:$0xff]
      %v186 = vld [vmem:[%s1 + $0x140] sm:$0xff]
      %v187 = vld [vmem:[%s1 + $0x148] sm:$0xff]
      %v188 = vld [vmem:[%s1 + $0x150] sm:$0xff]
      %v189 = vld [vmem:[%s1 + $0x158] sm:$0xff]
      %v190 = vld [vmem:[%s1 + $0x160] sm:$0xff]
      %v191 = vld [vmem:[%s1 + $0x168] sm:$0xff]
      %v192 = vld [vmem:[%s1 + $0x170] sm:$0xff]
      %v193 = vld [vmem:[%s1 + $0x178] sm:$0xff]
      %v194 = vld [vmem:[%s1 + $0x180] sm:$0xff]
      %v195 = vld [vmem:[%s1 + $0x188] sm:$0xff]
      %v196 = vld [vmem:[%s1 + $0x190] sm:$0xff]
      %v197 = vld [vmem:[%s1 + $0x198] sm:$0xff]
      %v198 = vld [vmem:[%s1 + $0x1a0] sm:$0xff]
      %v199 = vld [vmem:[%s1 + $0x1a8] sm:$0xff]
      %v200 = vld [vmem:[%s1 + $0x1b0] sm:$0xff]
      %v201 = vld [vmem:[%s1 + $0x1b8] sm:$0xff]
      %v202 = vld [vmem:[%s1 + $0x1c0] sm:$0xff]
      %v203 = vld [vmem:[%s1 + $0x1c8] sm:$0xff]
      %v204 = vld [vmem:[%s1 + $0x1d0] sm:$0xff]
      %v205 = vld [vmem:[%s1 + $0x1d8] sm:$0xff]
      %v206 = vld [vmem:[%s1 + $0x1e0] sm:$0xff]
      %v207 = vld [vmem:[%s1 + $0x1e8] sm:$0xff]
      %v208 = vld [vmem:[%s1 + $0x1f0] sm:$0xff]
      %v209 = vld [vmem:[%s1 + $0x1f8] sm:$0xff]
      %v210 = vld [vmem:[%s1 + $0x200] sm:$0xff]
      %v211 = vld [vmem:[%s1 + $0x208] sm:$0xff]
      %v212 = vld [vmem:[%s1 + $0x210] sm:$0xff]
      %v213 = vld [vmem:[%s1 + $0x218] sm:$0xff]
      %v214 = vld [vmem:[%s1 + $0x220] sm:$0xff]
      %v215 = vld [vmem:[%s1 + $0x228] sm:$0xff]
      %v216 = vld [vmem:[%s1 + $0x230] sm:$0xff]
      %v217 = vld [vmem:[%s1 + $0x238] sm:$0xff]
      %v218 = vld [vmem:[%s1 + $0x240] sm:$0xff]
      %v219 = vld [vmem:[%s1 + $0x248] sm:$0xff]
      %v220 = vld [vmem:[%s1 + $0x250] sm:$0xff]
      %v221 = vld [vmem:[%s1 + $0x258] sm:$0xff]
      %v222 = vld [vmem:[%s1 + $0x260] sm:$0xff]
      %v223 = vld [vmem:[%s1 + $0x268] sm:$0xff]
      %v224 = vld [vmem:[%s1 + $0x270] sm:$0xff]
      %v225 = vld [vmem:[%s1 + $0x278] sm:$0xff]
      %v226 = vld [vmem:[%s1 + $0x280] sm:$0xff]
      %v227 = vld [vmem:[%s1 + $0x288] sm:$0xff]
      %v228 = vld [vmem:[%s1 + $0x290] sm:$0xff]
      %v229 = vld [vmem:[%s1 + $0x298] sm:$0xff]
      %v230 = vld [vmem:[%s1 + $0x2a0] sm:$0xff]
      %v231 = vld [vmem:[%s1 + $0x2a8] sm:$0xff]
      %v232 = vld [vmem:[%s1 + $0x2b0] sm:$0xff]
      %v233 = vld [vmem:[%s1 + $0x2b8] sm:$0xff]
      %v234 = vld [vmem:[%s1 + $0x2c0] sm:$0xff]
      %v235 = vld [vmem:[%s1 + $0x2c8] sm:$0xff]
      %v236 = vld [vmem:[%s1 + $0x2d0] sm:$0xff]
      %v237 = vld [vmem:[%s1 + $0x2d8] sm:$0xff]
      %v238 = vld [vmem:[%s1 + $0x2e0] sm:$0xff]
      %v239 = vld [vmem:[%s1 + $0x2e8] sm:$0xff]
      %v240 = vld [vmem:[%s1 + $0x2f0] sm:$0xff]
      %v241 = vld [vmem:[%s1 + $0x2f8] sm:$0xff]
      %v242 = vld [vmem:[%s1 + $0x300] sm:$0xff]
      %v243 = vld [vmem:[%s1 + $0x308] sm:$0xff]
      %v244 = vld [vmem:[%s1 + $0x310] sm:$0xff]
      %v245 = vld [vmem:[%s1 + $0x318] sm:$0xff]
      %v246 = vld [vmem:[%s1 + $0x320] sm:$0xff]
      %v247 = vld [vmem:[%s1 + $0x328] sm:$0xff]
      %v248 = vld [vmem:[%s1 + $0x330] sm:$0xff]
      %v249 = vld [vmem:[%s1 + $0x338] sm:$0xff]
      %v250 = vld [vmem:[%s1 + $0x340] sm:$0xff]
      %v251 = vld [vmem:[%s1 + $0x348] sm:$0xff]
      %v252 = vld [vmem:[%s1 + $0x350] sm:$0xff]
      %v253 = vld [vmem:[%s1 + $0x358] sm:$0xff]
      %v254 = vld [vmem:[%s1 + $0x360] sm:$0xff]
      %v255 = vld [vmem:[%s1 + $0x368] sm:$0xff]
      %v256 = vld [vmem:[%s1 + $0x370] sm:$0xff]
      %v257 = vld [vmem:[%s1 + $0x378] sm:$0xff]
      %v258 = vld [vmem:[%s1 + $0x380] sm:$0xff]
      %v259 = vld [vmem:[%s1 + $0x388] sm:$0xff]
      %v260 = vld [vmem:[%s1 + $0x390] sm:$0xff]
      %v261 = vld [vmem:[%s1 + $0x398] sm:$0xff]
      %v262 = vld [vmem:[%s1 + $0x3a0] sm:$0xff]
      %v263 = vld [vmem:[%s1 + $0x3a8] sm:$0xff]
      %v264 = vld [vmem:[%s1 + $0x3b0] sm:$0xff]
      %v265 = vld [vmem:[%s1 + $0x3b8] sm:$0xff]
      %v266 = vld [vmem:[%s1 + $0x3c0] sm:$0xff]
      %v267 = vld [vmem:[%s1 + $0x3c8] sm:$0xff]
      %v268 = vld [vmem:[%s1 + $0x3d0] sm:$0xff]
      %v269 = vld [vmem:[%s1 + $0x3d8] sm:$0xff]
      %v270 = vld [vmem:[%s1 + $0x3e0] sm:$0xff]
      %v271 = vld [vmem:[%s1 + $0x3e8] sm:$0xff]
      %v272 = vld [vmem:[%s1 + $0x3f0] sm:$0xff]
      %v273 = vld [vmem:[%s1 + $0x3f8] sm:$0xff]
      %v274 = vld [vmem:[%s1 + $0x400] sm:$0xff]
      %v275 = vld [vmem:[%s1 + $0x408] sm:$0xff]
      %v276 = vld [vmem:[%s1 + $0x410] sm:$0xff]
      %v277 = vld [vmem:[%s1 + $0x418] sm:$0xff]
      %v278 = vld [vmem:[%s1 + $0x420] sm:$0xff]
      %v279 = vld [vmem:[%s1 + $0x428] sm:$0xff]
      %v280 = vld [vmem:[%s1 + $0x430] sm:$0xff]
      %v281 = vld [vmem:[%s1 + $0x438] sm:$0xff]
      %v282 = vld [vmem:[%s1 + $0x440] sm:$0xff]
      %v283 = vld [vmem:[%s1 + $0x448] sm:$0xff]
      %v284 = vld [vmem:[%s1 + $0x450] sm:$0xff]
      %v285 = vld [vmem:[%s1 + $0x458] sm:$0xff]
      %v286 = vld [vmem:[%s1 + $0x460] sm:$0xff]
      %v287 = vld [vmem:[%s1 + $0x468] sm:$0xff]
      %v288 = vld [vmem:[%s1 + $0x470] sm:$0xff]
      %v289 = vld [vmem:[%s1 + $0x478] sm:$0xff]
      %v290 = vld [vmem:[%s1 + $0x480] sm:$0xff]
      %v291 = vld [vmem:[%s1 + $0x488] sm:$0xff]
      %v292 = vld [vmem:[%s1 + $0x490] sm:$0xff]
      %v293 = vld [vmem:[%s1 + $0x498] sm:$0xff]
      %v294 = vld [vmem:[%s1 + $0x4a0] sm:$0xff]
      %v295 = vld [vmem:[%s1 + $0x4a8] sm:$0xff]
      %v296 = vld [vmem:[%s1 + $0x4b0] sm:$0xff]
      %v297 = vld [vmem:[%s1 + $0x4b8] sm:$0xff]
      %v298 = vld [vmem:[%s1 + $0x4c0] sm:$0xff]
      %v299 = vld [vmem:[%s1 + $0x4c8] sm:$0xff]
      %v300 = vld [vmem:[%s1 + $0x4d0] sm:$0xff]
      %v301 = vld [vmem:[%s1 + $0x4d8] sm:$0xff]
      %v302 = vld [vmem:[%s1 + $0x4e0] sm:$0xff]
      %v303 = vld [vmem:[%s1 + $0x4e8] sm:$0xff]
      %v304 = vld [vmem:[%s1 + $0x4f0] sm:$0xff]
      %v305 = vld [vmem:[%s1 + $0x4f8] sm:$0xff]
      %v306 = vld [vmem:[%s1 + $0x500] sm:$0xff]
      %v307 = vld [vmem:[%s1 + $0x508] sm:$0xff]
      %v308 = vld [vmem:[%s1 + $0x510] sm:$0xff]
      %v309 = vld [vmem:[%s1 + $0x518] sm:$0xff]
      %v310 = vld [vmem:[%s1 + $0x520] sm:$0xff]
      %v311 = vld [vmem:[%s1 + $0x528] sm:$0xff]
      %v312 = vld [vmem:[%s1 + $0x530] sm:$0xff]
      %v313 = vld [vmem:[%s1 + $0x538] sm:$0xff]
      %v314 = vld [vmem:[%s1 + $0x540] sm:$0xff]
      %v315 = vld [vmem:[%s1 + $0x548] sm:$0xff]
      %v316 = vld [vmem:[%s1 + $0x550] sm:$0xff]
      %v317 = vld [vmem:[%s1 + $0x558] sm:$0xff]
      %v318 = vld [vmem:[%s1 + $0x560] sm:$0xff]
      %v319 = vld [vmem:[%s1 + $0x568] sm:$0xff]
      %v320 = vld [vmem:[%s1 + $0x570] sm:$0xff]
      %v321 = vld [vmem:[%s1 + $0x578] sm:$0xff]
      %v322 = vld [vmem:[%s1 + $0x580] sm:$0xff]
      %v323 = vld [vmem:[%s1 + $0x588] sm:$0xff]
      %v324 = vld [vmem:[%s1 + $0x590] sm:$0xff]
      %v325 = vld [vmem:[%s1 + $0x598] sm:$0xff]
      %v326 = vld [vmem:[%s1 + $0x5a0] sm:$0xff]
      %v327 = vld [vmem:[%s1 + $0x5a8] sm:$0xff]
      %v328 = vld [vmem:[%s1 + $0x5b0] sm:$0xff]
      %v329 = vld [vmem:[%s1 + $0x5b8] sm:$0xff]
      %v330 = vld [vmem:[%s1 + $0x5c0] sm:$0xff]
      %v331 = vld [vmem:[%s1 + $0x5c8] sm:$0xff]
      %v332 = vld [vmem:[%s1 + $0x5d0] sm:$0xff]
      %v333 = vld [vmem:[%s1 + $0x5d8] sm:$0xff]
      %v334 = vld [vmem:[%s1 + $0x5e0] sm:$0xff]
      %v335 = vld [vmem:[%s1 + $0x5e8] sm:$0xff]
      %v336 = vld [vmem:[%s1 + $0x5f0] sm:$0xff]
      %v337 = vld [vmem:[%s1 + $0x5f8] sm:$0xff]
      %v338 = vld [vmem:[%s1 + $0x600] sm:$0xff]
      %v339 = vld [vmem:[%s1 + $0x608] sm:$0xff]
      %v340 = vld [vmem:[%s1 + $0x610] sm:$0xff]
      %v341 = vld [vmem:[%s1 + $0x618] sm:$0xff]
      %v342 = vld [vmem:[%s1 + $0x620] sm:$0xff]
      %v343 = vld [vmem:[%s1 + $0x628] sm:$0xff]
      %v344 = vld [vmem:[%s1 + $0x630] sm:$0xff]
      %v345 = vld [vmem:[%s1 + $0x638] sm:$0xff]
      %v346 = vld [vmem:[%s1 + $0x640] sm:$0xff]
      %v347 = vld [vmem:[%s1 + $0x648] sm:$0xff]
      %v348 = vld [vmem:[%s1 + $0x650] sm:$0xff]
      %v349 = vld [vmem:[%s1 + $0x658] sm:$0xff]
      %v350 = vld [vmem:[%s1 + $0x660] sm:$0xff]
      %v351 = vld [vmem:[%s1 + $0x668] sm:$0xff]
      %v352 = vld [vmem:[%s1 + $0x670] sm:$0xff]
      %v353 = vld [vmem:[%s1 + $0x678] sm:$0xff]
      %v354 = vld [vmem:[%s1 + $0x680] sm:$0xff]
      %v355 = vld [vmem:[%s1 + $0x688] sm:$0xff]
      %v356 = vld [vmem:[%s1 + $0x690] sm:$0xff]
      %v357 = vld [vmem:[%s1 + $0x698] sm:$0xff]
      %v358 = vld [vmem:[%s1 + $0x6a0] sm:$0xff]
      %v359 = vld [vmem:[%s1 + $0x6a8] sm:$0xff]
      %v360 = vld [vmem:[%s1 + $0x6b0] sm:$0xff]
      %v361 = vld [vmem:[%s1 + $0x6b8] sm:$0xff]
      %v362 = vld [vmem:[%s1 + $0x6c0] sm:$0xff]
      %v363 = vld [vmem:[%s1 + $0x6c8] sm:$0xff]
      %v364 = vld [vmem:[%s1 + $0x6d0] sm:$0xff]
      %v365 = vld [vmem:[%s1 + $0x6d8] sm:$0xff]
      %v366 = vld [vmem:[%s1 + $0x6e0] sm:$0xff]
      %v367 = vld [vmem:[%s1 + $0x6e8] sm:$0xff]
      %v368 = vld [vmem:[%s1 + $0x6f0] sm:$0xff]
      %v369 = vld [vmem:[%s1 + $0x6f8] sm:$0xff]
      %v370 = vld [vmem:[%s1 + $0x700] sm:$0xff]
      %v371 = vld [vmem:[%s1 + $0x708] sm:$0xff]
      %v372 = vld [vmem:[%s1 + $0x710] sm:$0xff]
      %v373 = vld [vmem:[%s1 + $0x718] sm:$0xff]
      %v374 = vld [vmem:[%s1 + $0x720] sm:$0xff]
      %v375 = vld [vmem:[%s1 + $0x728] sm:$0xff]
      %v376 = vld [vmem:[%s1 + $0x730] sm:$0xff]
      %v377 = vld [vmem:[%s1 + $0x738] sm:$0xff]
      %v378 = vld [vmem:[%s1 + $0x740] sm:$0xff]
      %v379 = vld [vmem:[%s1 + $0x748] sm:$0xff]
      %v380 = vld [vmem:[%s1 + $0x750] sm:$0xff]
      %v381 = vld [vmem:[%s1 + $0x758] sm:$0xff]
      %v382 = vld [vmem:[%s1 + $0x760] sm:$0xff]
      %v383 = vld [vmem:[%s1 + $0x768] sm:$0xff]
      %v384 = vld [vmem:[%s1 + $0x770] sm:$0xff]
      %v385 = vld [vmem:[%s1 + $0x778] sm:$0xff]
      %v386 = vld [vmem:[%s1 + $0x780] sm:$0xff]
      %v387 = vld [vmem:[%s1 + $0x788] sm:$0xff]
      %v388 = vld [vmem:[%s1 + $0x790] sm:$0xff]
      %v389 = vld [vmem:[%s1 + $0x798] sm:$0xff]
      %v390 = vld [vmem:[%s1 + $0x7a0] sm:$0xff]
      %v391 = vld [vmem:[%s1 + $0x7a8] sm:$0xff]
      %v392 = vld [vmem:[%s1 + $0x7b0] sm:$0xff]
      %v393 = vld [vmem:[%s1 + $0x7b8] sm:$0xff]
      %v394 = vld [vmem:[%s1 + $0x7c0] sm:$0xff]
      %v395 = vld [vmem:[%s1 + $0x7c8] sm:$0xff]
      %v396 = vld [vmem:[%s1 + $0x7d0] sm:$0xff]
      %v397 = vld [vmem:[%s1 + $0x7d8] sm:$0xff]
      %v398 = vld [vmem:[%s1 + $0x7e0] sm:$0xff]
      %v399 = vld [vmem:[%s1 + $0x7e8] sm:$0xff]
      %v400 = vld [vmem:[%s1 + $0x7f0] sm:$0xff]
      %v401 = vld [vmem:[%s1 + $0x7f8] sm:$0xff]
      %402 = vmatprep.subr.mxu0 %v147
      %403 = vmatpush1.msra.mxu0 %v146
      %404 = vmatprep.subr.mxu0 %v155
      %405 = vmatpush1.msra.mxu0 %v154
      %406 = vmatprep.subr.mxu0 %v163
      %407 = vmatpush1.msra.mxu0 %v162
      %408 = vmatprep.subr.mxu0 %v171
      %409 = vmatpush1.msra.mxu0 %v170
      %410 = vmatprep.subr.mxu0 %v179
      %411 = vmatpush1.msra.mxu0 %v178
      %412 = vmatprep.subr.mxu0 %v187
      %413 = vmatpush1.msra.mxu0 %v186
      %414 = vmatprep.subr.mxu0 %v195
      %415 = vmatpush1.msra.mxu0 %v194
      %416 = vmatprep.subr.mxu0 %v203
      %417 = vmatpush1.msra.mxu0 %v202
      %418 = vmatprep.subr.mxu0 %v211
      %419 = vmatpush1.msra.mxu0 %v210
      %420 = vmatprep.subr.mxu0 %v219
      %421 = vmatpush1.msra.mxu0 %v218
      %422 = vmatprep.subr.mxu0 %v227
      %423 = vmatpush1.msra.mxu0 %v226
      %424 = vmatprep.subr.mxu0 %v235
      %425 = vmatpush1.msra.mxu0 %v234
      %426 = vmatprep.subr.mxu0 %v243
      %427 = vmatpush1.msra.mxu0 %v242
      %428 = vmatprep.subr.mxu0 %v251
      %429 = vmatpush1.msra.mxu0 %v250
      %430 = vmatprep.subr.mxu0 %v259
      %431 = vmatpush1.msra.mxu0 %v258
      %432 = vmatprep.subr.mxu0 %v267
      %433 = vmatpush1.msra.mxu0 %v266
      %434 = vmatprep.subr.mxu0 %v275
      %435 = vmatpush1.msra.mxu0 %v274
      %436 = vmatprep.subr.mxu0 %v283
      %437 = vmatpush1.msra.mxu0 %v282
      %438 = vmatprep.subr.mxu0 %v291
      %439 = vmatpush1.msra.mxu0 %v290
      %440 = vmatprep.subr.mxu0 %v299
      %441 = vmatpush1.msra.mxu0 %v298
      %442 = vmatprep.subr.mxu0 %v307
      %443 = vmatpush1.msra.mxu0 %v306
      %444 = vmatprep.subr.mxu0 %v315
      %445 = vmatpush1.msra.mxu0 %v314
      %446 = vmatprep.subr.mxu0 %v323
      %447 = vmatpush1.msra.mxu0 %v322
      %448 = vmatprep.subr.mxu0 %v331
      %449 = vmatpush1.msra.mxu0 %v330
      %450 = vmatprep.subr.mxu0 %v339
      %451 = vmatpush1.msra.mxu0 %v338
      %452 = vmatprep.subr.mxu0 %v347
      %453 = vmatpush1.msra.mxu0 %v346
      %454 = vmatprep.subr.mxu0 %v355
      %455 = vmatpush1.msra.mxu0 %v354
      %456 = vmatprep.subr.mxu0 %v363
      %457 = vmatpush1.msra.mxu0 %v362
      %458 = vmatprep.subr.mxu0 %v371
      %459 = vmatpush1.msra.mxu0 %v370
      %460 = vmatprep.subr.mxu0 %v379
      %461 = vmatpush1.msra.mxu0 %v378
      %462 = vmatprep.subr.mxu0 %v387
      %463 = vmatpush1.msra.mxu0 %v386
      %464 = vmatprep.subr.mxu0 %v395
      %465 = vmatpush1.msra.mxu0 %v394
      %466 = vmatprep.mubr.f32.mxu0 %v145
      %467 = vmatmul.mubr.f32.gmra.mrb[0].mxu0 %v144
      %v468 = vpop.f32.mrb[0].mxu0
      %v469 = vadd.f32 0.0, %v468
      %v470 = vpop.f32.mrb[0].mxu0
      %v471 = vadd.f32 0.0, %v470
      %472 = vdwg.mxu0
      %473 = vmatprep.subr.mxu0 %v149
      %474 = vmatpush1.msra.mxu0 %v148
      %475 = vmatprep.subr.mxu0 %v157
      %476 = vmatpush1.msra.mxu0 %v156
      %477 = vmatprep.subr.mxu0 %v165
      %478 = vmatpush1.msra.mxu0 %v164
      %479 = vmatprep.subr.mxu0 %v173
      %480 = vmatpush1.msra.mxu0 %v172
      %481 = vmatprep.subr.mxu0 %v181
      %482 = vmatpush1.msra.mxu0 %v180
      %483 = vmatprep.subr.mxu0 %v189
      %484 = vmatpush1.msra.mxu0 %v188
      %485 = vmatprep.subr.mxu0 %v197
      %486 = vmatpush1.msra.mxu0 %v196
      %487 = vmatprep.subr.mxu0 %v205
      %488 = vmatpush1.msra.mxu0 %v204
      %489 = vmatprep.subr.mxu0 %v213
      %490 = vmatpush1.msra.mxu0 %v212
      %491 = vmatprep.subr.mxu0 %v221
      %492 = vmatpush1.msra.mxu0 %v220
      %493 = vmatprep.subr.mxu0 %v229
      %494 = vmatpush1.msra.mxu0 %v228
      %495 = vmatprep.subr.mxu0 %v237
      %496 = vmatpush1.msra.mxu0 %v236
      %497 = vmatprep.subr.mxu0 %v245
      %498 = vmatpush1.msra.mxu0 %v244
      %499 = vmatprep.subr.mxu0 %v253
      %500 = vmatpush1.msra.mxu0 %v252
      %501 = vmatprep.subr.mxu0 %v261
      %502 = vmatpush1.msra.mxu0 %v260
      %503 = vmatprep.subr.mxu0 %v269
      %504 = vmatpush1.msra.mxu0 %v268
      %505 = vmatprep.subr.mxu0 %v277
      %506 = vmatpush1.msra.mxu0 %v276
      %507 = vmatprep.subr.mxu0 %v285
      %508 = vmatpush1.msra.mxu0 %v284
      %509 = vmatprep.subr.mxu0 %v293
      %510 = vmatpush1.msra.mxu0 %v292
      %511 = vmatprep.subr.mxu0 %v301
      %512 = vmatpush1.msra.mxu0 %v300
      %513 = vmatprep.subr.mxu0 %v309
      %514 = vmatpush1.msra.mxu0 %v308
      %515 = vmatprep.subr.mxu0 %v317
      %516 = vmatpush1.msra.mxu0 %v316
      %517 = vmatprep.subr.mxu0 %v325
      %518 = vmatpush1.msra.mxu0 %v324
      %519 = vmatprep.subr.mxu0 %v333
      %520 = vmatpush1.msra.mxu0 %v332
      %521 = vmatprep.subr.mxu0 %v341
      %522 = vmatpush1.msra.mxu0 %v340
      %523 = vmatprep.subr.mxu0 %v349
      %524 = vmatpush1.msra.mxu0 %v348
      %525 = vmatprep.subr.mxu0 %v357
      %526 = vmatpush1.msra.mxu0 %v356
      %527 = vmatprep.subr.mxu0 %v365
      %528 = vmatpush1.msra.mxu0 %v364
      %529 = vmatprep.subr.mxu0 %v373
      %530 = vmatpush1.msra.mxu0 %v372
      %531 = vmatprep.subr.mxu0 %v381
      %532 = vmatpush1.msra.mxu0 %v380
      %533 = vmatprep.subr.mxu0 %v389
      %534 = vmatpush1.msra.mxu0 %v388
      %535 = vmatprep.subr.mxu0 %v397
      %536 = vmatpush1.msra.mxu0 %v396
      %537 = vmatprep.mubr.f32.mxu0 %v145
      %538 = vmatmul.mubr.f32.gmra.mrb[0].mxu0 %v144
      %v539 = vpop.f32.mrb[0].mxu0
      %v540 = vadd.f32 0.0, %v539
      %v541 = vpop.f32.mrb[0].mxu0
      %v542 = vadd.f32 0.0, %v541
      %543 = vdwg.mxu0
      %544 = vmatprep.subr.mxu0 %v151
      %545 = vmatpush1.msra.mxu0 %v150
      %546 = vmatprep.subr.mxu0 %v159
      %547 = vmatpush1.msra.mxu0 %v158
      %548 = vmatprep.subr.mxu0 %v167
      %549 = vmatpush1.msra.mxu0 %v166
      %550 = vmatprep.subr.mxu0 %v175
      %551 = vmatpush1.msra.mxu0 %v174
      %552 = vmatprep.subr.mxu0 %v183
      %553 = vmatpush1.msra.mxu0 %v182
      %554 = vmatprep.subr.mxu0 %v191
      %555 = vmatpush1.msra.mxu0 %v190
      %556 = vmatprep.subr.mxu0 %v199
      %557 = vmatpush1.msra.mxu0 %v198
      %558 = vmatprep.subr.mxu0 %v207
      %559 = vmatpush1.msra.mxu0 %v206
      %560 = vmatprep.subr.mxu0 %v215
      %561 = vmatpush1.msra.mxu0 %v214
      %562 = vmatprep.subr.mxu0 %v223
      %563 = vmatpush1.msra.mxu0 %v222
      %564 = vmatprep.subr.mxu0 %v231
      %565 = vmatpush1.msra.mxu0 %v230
      %566 = vmatprep.subr.mxu0 %v239
      %567 = vmatpush1.msra.mxu0 %v238
      %568 = vmatprep.subr.mxu0 %v247
      %569 = vmatpush1.msra.mxu0 %v246
      %570 = vmatprep.subr.mxu0 %v255
      %571 = vmatpush1.msra.mxu0 %v254
      %572 = vmatprep.subr.mxu0 %v263
      %573 = vmatpush1.msra.mxu0 %v262
      %574 = vmatprep.subr.mxu0 %v271
      %575 = vmatpush1.msra.mxu0 %v270
      %576 = vmatprep.subr.mxu0 %v279
      %577 = vmatpush1.msra.mxu0 %v278
      %578 = vmatprep.subr.mxu0 %v287
      %579 = vmatpush1.msra.mxu0 %v286
      %580 = vmatprep.subr.mxu0 %v295
      %581 = vmatpush1.msra.mxu0 %v294
      %582 = vmatprep.subr.mxu0 %v303
      %583 = vmatpush1.msra.mxu0 %v302
      %584 = vmatprep.subr.mxu0 %v311
      %585 = vmatpush1.msra.mxu0 %v310
      %586 = vmatprep.subr.mxu0 %v319
      %587 = vmatpush1.msra.mxu0 %v318
      %588 = vmatprep.subr.mxu0 %v327
      %589 = vmatpush1.msra.mxu0 %v326
      %590 = vmatprep.subr.mxu0 %v335
      %591 = vmatpush1.msra.mxu0 %v334
      %592 = vmatprep.subr.mxu0 %v343
      %593 = vmatpush1.msra.mxu0 %v342
      %594 = vmatprep.subr.mxu0 %v351
      %595 = vmatpush1.msra.mxu0 %v350
      %596 = vmatprep.subr.mxu0 %v359
      %597 = vmatpush1.msra.mxu0 %v358
      %598 = vmatprep.subr.mxu0 %v367
      %599 = vmatpush1.msra.mxu0 %v366
      %600 = vmatprep.subr.mxu0 %v375
      %601 = vmatpush1.msra.mxu0 %v374
      %602 = vmatprep.subr.mxu0 %v383
      %603 = vmatpush1.msra.mxu0 %v382
      %604 = vmatprep.subr.mxu0 %v391
      %605 = vmatpush1.msra.mxu0 %v390
      %606 = vmatprep.subr.mxu0 %v399
      %607 = vmatpush1.msra.mxu0 %v398
      %608 = vmatprep.mubr.f32.mxu0 %v145
      %609 = vmatmul.mubr.f32.gmra.mrb[0].mxu0 %v144
      %v610 = vpop.f32.mrb[0].mxu0
      %v611 = vadd.f32 0.0, %v610
      %v612 = vpop.f32.mrb[0].mxu0
      %v613 = vadd.f32 0.0, %v612
      %614 = vdwg.mxu0
      %615 = vmatprep.subr.mxu0 %v153
      %616 = vmatpush1.msra.mxu0 %v152
      %617 = vmatprep.subr.mxu0 %v161
      %618 = vmatpush1.msra.mxu0 %v160
      %619 = vmatprep.subr.mxu0 %v169
      %620 = vmatpush1.msra.mxu0 %v168
      %621 = vmatprep.subr.mxu0 %v177
      %622 = vmatpush1.msra.mxu0 %v176
      %623 = vmatprep.subr.mxu0 %v185
      %624 = vmatpush1.msra.mxu0 %v184
      %625 = vmatprep.subr.mxu0 %v193
      %626 = vmatpush1.msra.mxu0 %v192
      %627 = vmatprep.subr.mxu0 %v201
      %628 = vmatpush1.msra.mxu0 %v200
      %629 = vmatprep.subr.mxu0 %v209
      %630 = vmatpush1.msra.mxu0 %v208
      %631 = vmatprep.subr.mxu0 %v217
      %632 = vmatpush1.msra.mxu0 %v216
      %633 = vmatprep.subr.mxu0 %v225
      %634 = vmatpush1.msra.mxu0 %v224
      %635 = vmatprep.subr.mxu0 %v233
      %636 = vmatpush1.msra.mxu0 %v232
      %637 = vmatprep.subr.mxu0 %v241
      %638 = vmatpush1.msra.mxu0 %v240
      %639 = vmatprep.subr.mxu0 %v249
      %640 = vmatpush1.msra.mxu0 %v248
      %641 = vmatprep.subr.mxu0 %v257
      %642 = vmatpush1.msra.mxu0 %v256
      %643 = vmatprep.subr.mxu0 %v265
      %644 = vmatpush1.msra.mxu0 %v264
      %645 = vmatprep.subr.mxu0 %v273
      %646 = vmatpush1.msra.mxu0 %v272
      %647 = vmatprep.subr.mxu0 %v281
      %648 = vmatpush1.msra.mxu0 %v280
      %649 = vmatprep.subr.mxu0 %v289
      %650 = vmatpush1.msra.mxu0 %v288
      %651 = vmatprep.subr.mxu0 %v297
      %652 = vmatpush1.msra.mxu0 %v296
      %653 = vmatprep.subr.mxu0 %v305
      %654 = vmatpush1.msra.mxu0 %v304
      %655 = vmatprep.subr.mxu0 %v313
      %656 = vmatpush1.msra.mxu0 %v312
      %657 = vmatprep.subr.mxu0 %v321
      %658 = vmatpush1.msra.mxu0 %v320
      %659 = vmatprep.subr.mxu0 %v329
      %660 = vmatpush1.msra.mxu0 %v328
      %661 = vmatprep.subr.mxu0 %v337
      %662 = vmatpush1.msra.mxu0 %v336
      %663 = vmatprep.subr.mxu0 %v345
      %664 = vmatpush1.msra.mxu0 %v344
      %665 = vmatprep.subr.mxu0 %v353
      %666 = vmatpush1.msra.mxu0 %v352
      %667 = vmatprep.subr.mxu0 %v361
      %668 = vmatpush1.msra.mxu0 %v360
      %669 = vmatprep.subr.mxu0 %v369
      %670 = vmatpush1.msra.mxu0 %v368
      %671 = vmatprep.subr.mxu0 %v377
      %672 = vmatpush1.msra.mxu0 %v376
      %673 = vmatprep.subr.mxu0 %v385
      %674 = vmatpush1.msra.mxu0 %v384
      %675 = vmatprep.subr.mxu0 %v393
      %676 = vmatpush1.msra.mxu0 %v392
      %677 = vmatprep.subr.mxu0 %v401
      %678 = vmatpush1.msra.mxu0 %v400
      %679 = vmatprep.mubr.f32.mxu0 %v145
      %680 = vmatmul.mubr.f32.gmra.mrb[0].mxu0 %v144
      %v681 = vpop.f32.mrb[0].mxu0
      %v682 = vadd.f32 0.0, %v681
      %v683 = vpop.f32.mrb[0].mxu0
      %v684 = vadd.f32 0.0, %v683
      %685 = vdwg.mxu0
      %686 = vst [vmem:[%s143] sm:$0xff] %v469
      %687 = vst [vmem:[%s143 + $0x8] sm:$0xff] %v471
      %688 = vst [vmem:[%s143 + $0x10] sm:$0xff] %v540
      %689 = vst [vmem:[%s143 + $0x18] sm:$0xff] %v542
      %690 = vst [vmem:[%s143 + $0x20] sm:$0xff] %v611
      %691 = vst [vmem:[%s143 + $0x28] sm:$0xff] %v613
      %692 = vst [vmem:[%s143 + $0x30] sm:$0xff] %v682
      %693 = vst [vmem:[%s143 + $0x38] sm:$0xff] %v684
      %p694 = scmp.lt.s32.totalorder %s13, 1
      %s695 = scalar_select %p694, %s13, 1
      %s696 = smul.addr %s695, 8
      %s697 = smul.addr %s696, 8
      %s698 = scalar_lea.vmem %s2, %s697
      // Predicated region
      $region29: #{interpolate.1} parent=27 // pred_check
        %p699 = pneg %p78
      $region30: #{interpolate.1} parent=27 // pred_check_branch
        %701 = sbr.rel (%p699) target = $region32
      $region31: #{interpolate.1} parent=27 // pred_region
        _
      $region32: #{interpolate.1} parent=27 // pred_fallthru
        _
    $region28: #{interpolate.1} parent=5 // pred_fallthru
      _
    %p702 = scmp.le.s32.totalorder 2, %s8
    // Predicated region
    $region33: #{interpolate.1} parent=5 // pred_check
      %p703 = pneg %p702
    $region34: #{interpolate.1} parent=5 // pred_check_branch
      %705 = sbr.rel (%p703) target = $region36
    $region35: #{interpolate.1} parent=5 // pred_region
      %s706 = ssub.s32 %s8, 2
      // Predicated region
      $region37: #{interpolate.1} parent=35 // pred_check
        %p707 = pneg %p84
      $region38: #{interpolate.1} parent=35 // pred_check_branch
        %709 = sbr.rel (%p707) target = $region40
      $region39: #{interpolate.1} parent=35 // pred_region
        %p710 = scmp.lt.s32.totalorder %s14, 1
        %s711 = scalar_select %p710, %s14, 1
        %s712 = smul.addr %s711, 8
        %s713 = smul.addr %s712, 8
        %s714 = scalar_lea.vmem %s2, %s713
      $region40: #{interpolate.1} parent=35 // pred_fallthru
        _
    $region36: #{interpolate.1} parent=5 // pred_fallthru
      _
  $region6: #{interpolate.1} parent=0 // loop_footer
    %s12 = sadd.s32 1, %s8
  $region7: #{interpolate.1} parent=0 // loop_footer_branch
    %7 = sbr.rel target = $region3
  $region8: #{interpolate.1} parent=0 // loop_exit
    _

</llo_original>
